<compile_context>
chip_gen: v5e
topology: v5e:2x2
jax: 0.10.0
libtpu: 0.0.40
codegen_flags: <defaults>
</compile_context>

<pallas_src>
from functools import partial

import jax
import jax.numpy as jnp
from jax.experimental import pallas as pl
from jax.experimental.pallas import tpu as pltpu


# ---------------------------------------------------------------------------
# Kernel (transposed dataflow: batch on the lane axis)
# ---------------------------------------------------------------------------
def housing_mlp_kernel(x_ref, w1_ref, w2_ref, w3_ref, p_ref, o_ref):
    # Packed small-parameter tile (128, 8) f32, one column per vector:
    #   col 0: b1 (128)   col 1: b2 (64)   col 2: b3 (32)
    #   col 3: w4 (32)    col 4[0]: b4
    p = p_ref[...]
    b1 = p[:, 0:1]            # (128, 1)
    b2 = p[0:64, 1:2]         # (64, 1)
    b3 = p[0:32, 2:3]         # (32, 1)
    w4 = p[0:32, 3:4]         # (32, 1)
    b4 = p[0:1, 4:5]          # (1, 1)

    x = x_ref[...]            # (D, bb) bf16, lane-dense on batch

    # layer1+bn1 -> relu   (dropout is identity in eval mode)
    h = jnp.dot(w1_ref[...], x, preferred_element_type=jnp.float32)   # (128, bb)
    h = jnp.maximum(h + b1, 0.0)
    # layer2+bn2 -> relu
    h = jnp.dot(w2_ref[...], h.astype(jnp.bfloat16),
                preferred_element_type=jnp.float32)                   # (64, bb)
    h = jnp.maximum(h + b2, 0.0)
    # layer3+bn3 -> relu
    h = jnp.dot(w3_ref[...], h.astype(jnp.bfloat16),
                preferred_element_type=jnp.float32)                   # (32, bb)
    h = jnp.maximum(h + b3, 0.0)
    # layer4: 1-wide output via VPU mul + XLU sublane reduce (no 1-row MXU op);
    # result is a lane-dense (1, bb) row.
    o_ref[...] = jnp.sum(h * w4, axis=0, keepdims=True) + b4


# ---------------------------------------------------------------------------
# Wrapper
# ---------------------------------------------------------------------------
def _cost_estimate(batch, d_in):
    flops = 2 * batch * (d_in * 128 + 128 * 64 + 64 * 32 + 32)
    bytes_accessed = (2 * batch * d_in                          # x (bf16)
                      + 2 * (d_in * 128 + 128 * 64 + 64 * 32)   # weights (bf16)
                      + 4 * 128 * 8                             # packed vectors
                      + 4 * batch)                              # output (f32)
    return pl.CostEstimate(flops=flops, transcendentals=0,
                           bytes_accessed=bytes_accessed)


@partial(jax.jit, static_argnames=("block_b",))
def housing_nn_forward(x, folded_params, *, block_b=2048):
    """Fused eval-mode forward pass.

    folded_params = (w1t, w2t, w3t, packed): BN folded in, weights transposed
    to (out, in) and cast to bf16, small vectors packed into one (128, 8) tile.
    Returns (B, 1) f32, matching the PyTorch module.
    """
    w1t, w2t, w3t, packed = folded_params
    B, D = x.shape

    # Transpose + cast fuse into a single pass over x under jit; the kernel
    # then sees lane-dense (D, B) tiles.
    xt = x.astype(jnp.bfloat16).T                     # (D, B)

    if B <= 128:
        bb = B                                        # one full-array block
    else:
        # Aim for >= 2 blocks (feeds both v7x TCs via the "parallel" axis),
        # 128-aligned, capped at block_b.  block_b=2048 keeps live VMEM ~3 MB.
        half = pl.cdiv(pl.cdiv(B, 2), 128) * 128
        bb = max(128, min(block_b, half))
    n_blocks = pl.cdiv(B, bb)                         # last block may be ragged

    out = pl.pallas_call(
        housing_mlp_kernel,
        out_shape=jax.ShapeDtypeStruct((1, B), jnp.float32),
        grid_spec=pltpu.PrefetchScalarGridSpec(
            num_scalar_prefetch=0,
            grid=(n_blocks,),
            in_specs=[
                pl.BlockSpec((D, bb), lambda i: (0, i)),        # x^T tile
                pl.BlockSpec(w1t.shape, lambda i: (0, 0)),      # weight-resident
                pl.BlockSpec(w2t.shape, lambda i: (0, 0)),
                pl.BlockSpec(w3t.shape, lambda i: (0, 0)),
                pl.BlockSpec(packed.shape, lambda i: (0, 0)),
            ],
            out_specs=pl.BlockSpec((1, bb), lambda i: (0, i)),  # lane-dense row
        ),
        compiler_params=pltpu.CompilerParams(
            dimension_semantics=("parallel",)),       # shards across v7x's 2 TCs
        cost_estimate=_cost_estimate(B, D),
    )(xt, w1t, w2t, w3t, packed)
    return out.reshape(B, 1)


# ---------------------------------------------------------------------------
# Host-side parameter construction / folding
# ---------------------------------------------------------------------------
def make_raw_params(key, input_dim):
    """Deterministic synthetic parameters matching HousingNN(input_dim)."""
    ks = jax.random.split(key, 20)

    def linear(kw, kb, fan_in, fan_out):
        bound = 1.0 / jnp.sqrt(jnp.float32(fan_in))
        w = jax.random.uniform(kw, (fan_in, fan_out), jnp.float32, -bound, bound)
        b = jax.random.uniform(kb, (fan_out,), jnp.float32, -bound, bound)
        return w, b

    def bn(kg, kb, km, kv, n):
        gamma = 1.0 + 0.1 * jax.random.normal(kg, (n,), jnp.float32)
        beta = 0.1 * jax.random.normal(kb, (n,), jnp.float32)
        rmean = 0.1 * jax.random.normal(km, (n,), jnp.float32)
        rvar = jax.random.uniform(kv, (n,), jnp.float32, 0.5, 1.5)
        return (gamma, beta, rmean, rvar)

    w1, b1 = linear(ks[0], ks[1], input_dim, 128)
    bn1 = bn(ks[2], ks[3], ks[4], ks[5], 128)
    w2, b2 = linear(ks[6], ks[7], 128, 64)
    bn2 = bn(ks[8], ks[9], ks[10], ks[11], 64)
    w3, b3 = linear(ks[12], ks[13], 64, 32)
    bn3 = bn(ks[14], ks[15], ks[16], ks[17], 32)
    w4, b4 = linear(ks[18], ks[19], 32, 1)
    return (w1, b1, bn1, w2, b2, bn2, w3, b3, bn3, w4, b4)


def fold_params(raw, eps=1e-5):
    """Fold eval-mode BN into weights/biases (in f32), transpose to (out, in),
    cast weights to bf16, and pack small vectors into one (128, 8) f32 tile."""
    (w1, b1, bn1, w2, b2, bn2, w3, b3, bn3, w4, b4) = raw

    def fold(w, b, bn_p):
        gamma, beta, rmean, rvar = bn_p
        s = gamma / jnp.sqrt(rvar + eps)
        t = beta - rmean * s
        return w * s[None, :], b * s + t

    w1f, b1f = fold(w1, b1, bn1)
    w2f, b2f = fold(w2, b2, bn2)
    w3f, b3f = fold(w3, b3, bn3)

    w1t = w1f.T.astype(jnp.bfloat16)      # (128, D)
    w2t = w2f.T.astype(jnp.bfloat16)      # (64, 128)
    w3t = w3f.T.astype(jnp.bfloat16)      # (32, 64)

    packed = jnp.zeros((128, 8), jnp.float32)
    packed = packed.at[:, 0].set(b1f)
    packed = packed.at[:64, 1].set(b2f)
    packed = packed.at[:32, 2].set(b3f)
    packed = packed.at[:32, 3].set(w4[:, 0])
    packed = packed.at[0, 4].set(b4[0])
    return (w1t, w2t, w3t, packed)


def reference_forward(x, raw, eps=1e-5):
    """Pure-JAX f32 reference of the eval-mode PyTorch forward (BN unfolded)."""
    (w1, b1, bn1, w2, b2, bn2, w3, b3, bn3, w4, b4) = raw

    def bn(h, p):
        gamma, beta, rmean, rvar = p
        return (h - rmean) / jnp.sqrt(rvar + eps) * gamma + beta

    h = jnp.maximum(bn(x @ w1 + b1, bn1), 0.0)   # dropout = identity (eval)
    h = jnp.maximum(bn(h @ w2 + b2, bn2), 0.0)
    h = jnp.maximum(bn(h @ w3 + b3, bn3), 0.0)
    return h @ w4 + b4


def folded_reference_forward(x, folded):
    """Pure-JAX reference that mirrors the kernel math (bf16 + f32 accum)."""
    w1t, w2t, w3t, packed = folded
    b1 = packed[:, 0:1]
    b2 = packed[0:64, 1:2]
    b3 = packed[0:32, 2:3]
    w4 = packed[0:32, 3:4]
    b4 = packed[0:1, 4:5]
    xt = x.astype(jnp.bfloat16).T
    h = jnp.maximum(jnp.dot(w1t, xt, preferred_element_type=jnp.float32) + b1, 0.0)
    h = jnp.maximum(jnp.dot(w2t, h.astype(jnp.bfloat16),
                            preferred_element_type=jnp.float32) + b2, 0.0)
    h = jnp.maximum(jnp.dot(w3t, h.astype(jnp.bfloat16),
                            preferred_element_type=jnp.float32) + b3, 0.0)
    o = jnp.sum(h * w4, axis=0, keepdims=True) + b4
    return o.reshape(-1, 1)


# ---------------------------------------------------------------------------
if __name__ == "__main__":
    key = jax.random.PRNGKey(0)
    k_x, k_xl, k_p = jax.random.split(key, 3)

    input_dim = 16
    raw = make_raw_params(k_p, input_dim)
    folded = fold_params(raw)

    # Small batch: single full-array block (grid of 1).
    batch = 8
    x = jax.random.normal(k_x, (batch, input_dim), jnp.float32)
    out = jax.block_until_ready(housing_nn_forward(x, folded))
    assert out.shape == (batch, 1)
    assert jnp.allclose(out, folded_reference_forward(x, folded),
                        atol=1e-3, rtol=1e-3), "small-batch kernel mismatch"
    assert jnp.allclose(out, reference_forward(x, raw),
                        atol=5e-2, rtol=5e-2), "small-batch bf16 drift"

    # Larger batch: 2-block "parallel" grid, ragged last block, no host pad.
    big = 1000
    x_big = jax.random.normal(k_xl, (big, input_dim), jnp.float32)
    out_big = jax.block_until_ready(housing_nn_forward(x_big, folded))
    assert out_big.shape == (big, 1)
    assert jnp.allclose(out_big, folded_reference_forward(x_big, folded),
                        atol=1e-3, rtol=1e-3), "big-batch kernel mismatch"
    assert jnp.allclose(out_big, reference_forward(x_big, raw),
                        atol=5e-2, rtol=5e-2), "big-batch bf16 drift"

    print("KERNEL_OK")
</pallas_src>

<mosaic_0001>
module attributes {stable_mosaic.version = 11 : i64} {
  func.func @housing_mlp_kernel(%arg0: i32, %arg1: memref<16x8xbf16, #tpu.memory_space<vmem>>, %arg2: memref<128x16xbf16, #tpu.memory_space<vmem>>, %arg3: memref<64x128xbf16, #tpu.memory_space<vmem>>, %arg4: memref<32x64xbf16, #tpu.memory_space<vmem>>, %arg5: memref<128x8xf32, #tpu.memory_space<vmem>>, %arg6: memref<1x8xf32, #tpu.memory_space<vmem>>) attributes {dimension_semantics = [#tpu.dimension_semantics<parallel>], iteration_bounds = array<i64: 1>, scalar_prefetch = 0 : i64, scratch_operands = 0 : i64, tpu.core_type = #tpu.core_type<tc>, window_params = [{transform_indices = @transform_0, window_bounds = array<i64: 16, 8>}, {pipeline_mode = #tpu.pipeline_mode<synchronous>, transform_indices = @transform_1, window_bounds = array<i64: 128, 16>}, {pipeline_mode = #tpu.pipeline_mode<synchronous>, transform_indices = @transform_2, window_bounds = array<i64: 64, 128>}, {pipeline_mode = #tpu.pipeline_mode<synchronous>, transform_indices = @transform_3, window_bounds = array<i64: 32, 64>}, {pipeline_mode = #tpu.pipeline_mode<synchronous>, transform_indices = @transform_4, window_bounds = array<i64: 128, 8>}, {transform_indices = @transform_5, window_bounds = array<i64: 1, 8>}]} {
    %c0 = arith.constant 0 : index
    %c0_0 = arith.constant 0 : index
    %0 = vector.load %arg5[%c0, %c0_0] : memref<128x8xf32, #tpu.memory_space<vmem>>, vector<128x8xf32>
    %1 = vector.extract_strided_slice %0 {offsets = [0, 0], sizes = [128, 1], strides = [1, 1]} : vector<128x8xf32> to vector<128x1xf32>
    %2 = vector.extract_strided_slice %0 {offsets = [0, 1], sizes = [64, 1], strides = [1, 1]} : vector<128x8xf32> to vector<64x1xf32>
    %3 = vector.extract_strided_slice %0 {offsets = [0, 2], sizes = [32, 1], strides = [1, 1]} : vector<128x8xf32> to vector<32x1xf32>
    %4 = vector.extract_strided_slice %0 {offsets = [0, 3], sizes = [32, 1], strides = [1, 1]} : vector<128x8xf32> to vector<32x1xf32>
    %5 = vector.extract_strided_slice %0 {offsets = [0, 4], sizes = [1, 1], strides = [1, 1]} : vector<128x8xf32> to vector<1x1xf32>
    %c0_1 = arith.constant 0 : index
    %c0_2 = arith.constant 0 : index
    %6 = vector.load %arg1[%c0_1, %c0_2] : memref<16x8xbf16, #tpu.memory_space<vmem>>, vector<16x8xbf16>
    %c0_3 = arith.constant 0 : index
    %c0_4 = arith.constant 0 : index
    %7 = vector.load %arg2[%c0_3, %c0_4] : memref<128x16xbf16, #tpu.memory_space<vmem>>, vector<128x16xbf16>
    %cst = arith.constant dense<0.000000e+00> : vector<128x8xf32>
    %8 = tpu.matmul %7, %6, %cst {dimension_numbers = #tpu.dot_dimension_numbers<[1], [0], [0], [1], [0, 0, 1, 1], [], []>} : vector<128x16xbf16>, vector<16x8xbf16>, vector<128x8xf32> -> vector<128x8xf32>
    %9 = vector.broadcast %1 : vector<128x1xf32> to vector<128x8xf32>
    %10 = arith.addf %8, %9 : vector<128x8xf32>
    %cst_5 = arith.constant 0.000000e+00 : f32
    %11 = vector.broadcast %cst_5 : f32 to vector<128x8xf32>
    %12 = arith.maximumf %10, %11 : vector<128x8xf32>
    %c0_6 = arith.constant 0 : index
    %c0_7 = arith.constant 0 : index
    %13 = vector.load %arg3[%c0_6, %c0_7] : memref<64x128xbf16, #tpu.memory_space<vmem>>, vector<64x128xbf16>
    %14 = arith.truncf %12 : vector<128x8xf32> to vector<128x8xbf16>
    %cst_8 = arith.constant dense<0.000000e+00> : vector<64x8xf32>
    %15 = tpu.matmul %13, %14, %cst_8 {dimension_numbers = #tpu.dot_dimension_numbers<[1], [0], [0], [1], [0, 0, 1, 1], [], []>} : vector<64x128xbf16>, vector<128x8xbf16>, vector<64x8xf32> -> vector<64x8xf32>
    %16 = vector.broadcast %2 : vector<64x1xf32> to vector<64x8xf32>
    %17 = arith.addf %15, %16 : vector<64x8xf32>
    %cst_9 = arith.constant 0.000000e+00 : f32
    %18 = vector.broadcast %cst_9 : f32 to vector<64x8xf32>
    %19 = arith.maximumf %17, %18 : vector<64x8xf32>
    %c0_10 = arith.constant 0 : index
    %c0_11 = arith.constant 0 : index
    %20 = vector.load %arg4[%c0_10, %c0_11] : memref<32x64xbf16, #tpu.memory_space<vmem>>, vector<32x64xbf16>
    %21 = arith.truncf %19 : vector<64x8xf32> to vector<64x8xbf16>
    %cst_12 = arith.constant dense<0.000000e+00> : vector<32x8xf32>
    %22 = tpu.matmul %20, %21, %cst_12 {dimension_numbers = #tpu.dot_dimension_numbers<[1], [0], [0], [1], [0, 0, 1, 1], [], []>} : vector<32x64xbf16>, vector<64x8xbf16>, vector<32x8xf32> -> vector<32x8xf32>
    %23 = vector.broadcast %3 : vector<32x1xf32> to vector<32x8xf32>
    %24 = arith.addf %22, %23 : vector<32x8xf32>
    %cst_13 = arith.constant 0.000000e+00 : f32
    %25 = vector.broadcast %cst_13 : f32 to vector<32x8xf32>
    %26 = arith.maximumf %24, %25 : vector<32x8xf32>
    %27 = vector.broadcast %4 : vector<32x1xf32> to vector<32x8xf32>
    %28 = arith.mulf %26, %27 : vector<32x8xf32>
    %cst_14 = arith.constant dense<0.000000e+00> : vector<8xf32>
    %29 = vector.multi_reduction <add>, %28, %cst_14 [0] : vector<32x8xf32> to vector<8xf32>
    %30 = vector.shape_cast %29 : vector<8xf32> to vector<1x8xf32>
    %31 = vector.broadcast %5 : vector<1x1xf32> to vector<1x8xf32>
    %32 = arith.addf %30, %31 : vector<1x8xf32>
    %c0_15 = arith.constant 0 : index
    %c0_16 = arith.constant 0 : index
    %33 = vector.load %arg6[%c0_15, %c0_16] : memref<1x8xf32, #tpu.memory_space<vmem>>, vector<1x8xf32>
    tpu.vector_store %arg6[%c0_15, %c0_16], %32 {strides = array<i32>} : memref<1x8xf32, #tpu.memory_space<vmem>>, vector<1x8xf32>,
    return
  }
  func.func @transform_0(%arg0: i32) -> (i32, i32) {
    %c0_i32 = arith.constant 0 : i32
    %c0_i32_0 = arith.constant 0 : i32
    return %c0_i32, %arg0 : i32, i32
  }
  func.func @transform_1(%arg0: i32) -> (i32, i32) {
    %c0_i32 = arith.constant 0 : i32
    %c0_i32_0 = arith.constant 0 : i32
    %c0_i32_1 = arith.constant 0 : i32
    return %c0_i32, %c0_i32_0 : i32, i32
  }
  func.func @transform_2(%arg0: i32) -> (i32, i32) {
    %c0_i32 = arith.constant 0 : i32
    %c0_i32_0 = arith.constant 0 : i32
    %c0_i32_1 = arith.constant 0 : i32
    return %c0_i32, %c0_i32_0 : i32, i32
  }
  func.func @transform_3(%arg0: i32) -> (i32, i32) {
    %c0_i32 = arith.constant 0 : i32
    %c0_i32_0 = arith.constant 0 : i32
    %c0_i32_1 = arith.constant 0 : i32
    return %c0_i32, %c0_i32_0 : i32, i32
  }
  func.func @transform_4(%arg0: i32) -> (i32, i32) {
    %c0_i32 = arith.constant 0 : i32
    %c0_i32_0 = arith.constant 0 : i32
    %c0_i32_1 = arith.constant 0 : i32
    return %c0_i32, %c0_i32_0 : i32, i32
  }
  func.func @transform_5(%arg0: i32) -> (i32, i32) {
    %c0_i32 = arith.constant 0 : i32
    %c0_i32_0 = arith.constant 0 : i32
    return %c0_i32, %arg0 : i32, i32
  }
}

</mosaic_0001>

<llo_original>
// kernel: housing_nn_forward.1
$region0: #{housing_nn_forward.1}
  #allocation0 [shape = 'u32[]', space=smem, size = 0x4, offset = 0x4, fixed_abs, tag = 'smem constant byte address 0x4 - core index']
  #allocation1 [shape = 'u32[72,128]{1,0:T(1,128)}', space=vmem, size = 0x9000, scoped, tag = 'internal scratch']
  %s0 = inlined_call_operand.vmem [shape: bf16[16,8], index: 0, kind: input, shape index: {}]
  %s1 = inlined_call_operand.vmem [shape: bf16[128,16], index: 1, kind: input, shape index: {}]
  %s2 = inlined_call_operand.vmem [shape: bf16[64,128], index: 2, kind: input, shape index: {}]
  %s3 = inlined_call_operand.vmem [shape: bf16[32,64], index: 3, kind: input, shape index: {}]
  %s4 = inlined_call_operand.vmem [shape: f32[128,8], index: 4, kind: input, shape index: {}]
  %s5 = inlined_call_operand.hbm [shape: f32[1,8], index: 5, kind: output, shape index: {}]
  %s6 = sld [smem:[#allocation0]]
  $region30: #{housing_nn_forward.1} parent=0
    _
  %s8 = ssub.s32 1, %s6
  %s9 = scalar_select 0, %s8, %s6
  $region1: #{housing_nn_forward.1} parent=0
    #allocation2 [shape = 'u8[512]{0}', space=vmem, size = 0x400, scoped, tag = 'output window, operand 0, single buffered']
    #allocation3 [shape = 's32[1]{0}', space=sflag, size = 0x4, scoped, tag = 'scoped memory for housing_nn_forward.1']
    %10 = vsyncpa [#allocation3], 0
    // Predicated region
    $region2: #{housing_nn_forward.1} parent=1 // pred_check
      _
    $region3: #{housing_nn_forward.1} parent=1 // pred_check_branch
      %12 = sbr.rel (0) target = $region5
    $region4: #{housing_nn_forward.1} parent=1 // pred_region
      _
    $region5: #{housing_nn_forward.1} parent=1 // pred_fallthru
      _
    // Predicated region
    $region6: #{housing_nn_forward.1} parent=1 // pred_check
      _
    $region7: #{housing_nn_forward.1} parent=1 // pred_check_branch
      %14 = sbr.rel (0) target = $region9
    $region8: #{housing_nn_forward.1} parent=1 // pred_region
      _
    $region9: #{housing_nn_forward.1} parent=1 // pred_fallthru
      _
    // Predicated region
    $region10: #{housing_nn_forward.1} parent=1 // pred_check
      _
    $region11: #{housing_nn_forward.1} parent=1 // pred_check_branch
      %16 = sbr.rel (0) target = $region13
    $region12: #{housing_nn_forward.1} parent=1 // pred_region
      _
    $region13: #{housing_nn_forward.1} parent=1 // pred_fallthru
      _
    // Predicated region
    $region14: #{housing_nn_forward.1} parent=1 // pred_check
      _
    $region15: #{housing_nn_forward.1} parent=1 // pred_check_branch
      %18 = sbr.rel (0) target = $region17
    $region16: #{housing_nn_forward.1} parent=1 // pred_region
      _
    $region17: #{housing_nn_forward.1} parent=1 // pred_fallthru
      _
    // Predicated region
    $region18: #{housing_nn_forward.1} parent=1 // pred_check
      _
    $region19: #{housing_nn_forward.1} parent=1 // pred_check_branch
      %20 = sbr.rel (0) target = $region21
    $region20: #{housing_nn_forward.1} parent=1 // pred_region
      _
    $region21: #{housing_nn_forward.1} parent=1 // pred_fallthru
      _
    %v22 = vld [vmem:[%s4] sm:$0xff]
    %v23 = vld [vmem:[%s4 + $0x8] sm:$0xff]
    %v24 = vld [vmem:[%s4 + $0x10] sm:$0xff]
    %v25 = vld [vmem:[%s4 + $0x18] sm:$0xff]
    %v26 = vld [vmem:[%s4 + $0x20] sm:$0xff]
    %v27 = vld [vmem:[%s4 + $0x28] sm:$0xff]
    %v28 = vld [vmem:[%s4 + $0x30] sm:$0xff]
    %v29 = vld [vmem:[%s4 + $0x38] sm:$0xff]
    %v30 = vld [vmem:[%s4 + $0x40] sm:$0xff]
    %v31 = vld [vmem:[%s4 + $0x48] sm:$0xff]
    %v32 = vld [vmem:[%s4 + $0x50] sm:$0xff]
    %v33 = vld [vmem:[%s4 + $0x58] sm:$0xff]
    %v34 = vld [vmem:[%s4 + $0x60] sm:$0xff]
    %v35 = vld [vmem:[%s4 + $0x68] sm:$0xff]
    %v36 = vld [vmem:[%s4 + $0x70] sm:$0xff]
    %v37 = vld [vmem:[%s4 + $0x78] sm:$0xff]
    %v38 = vld [vmem:[%s0] sm:$0xf]
    %v39 = vld [vmem:[%s0 + $0x4] sm:$0xf]
    %v40 = vld [vmem:[%s1] sm:$0xf]
    %v41 = vld [vmem:[%s1 + $0x4] sm:$0xf]
    %v42 = vld [vmem:[%s1 + $0x8] sm:$0xf]
    %v43 = vld [vmem:[%s1 + $0xc] sm:$0xf]
    %v44 = vld [vmem:[%s1 + $0x10] sm:$0xf]
    %v45 = vld [vmem:[%s1 + $0x14] sm:$0xf]
    %v46 = vld [vmem:[%s1 + $0x18] sm:$0xf]
    %v47 = vld [vmem:[%s1 + $0x1c] sm:$0xf]
    %v48 = vld [vmem:[%s1 + $0x20] sm:$0xf]
    %v49 = vld [vmem:[%s1 + $0x24] sm:$0xf]
    %v50 = vld [vmem:[%s1 + $0x28] sm:$0xf]
    %v51 = vld [vmem:[%s1 + $0x2c] sm:$0xf]
    %v52 = vld [vmem:[%s1 + $0x30] sm:$0xf]
    %v53 = vld [vmem:[%s1 + $0x34] sm:$0xf]
    %v54 = vld [vmem:[%s1 + $0x38] sm:$0xf]
    %v55 = vld [vmem:[%s1 + $0x3c] sm:$0xf]
    %57 = vset.pattern.permute.xlu0 0
    %58 = vperm.xlu0 %57, %v22
    %v59 = vpop.permute.xlu0 %58
    %62 = vset.pattern.permute.xlu0 0
    %63 = vperm.xlu0 %62, %v23
    %v64 = vpop.permute.xlu0 %63
    %67 = vset.pattern.permute.xlu0 0
    %68 = vperm.xlu0 %67, %v24
    %v69 = vpop.permute.xlu0 %68
    %72 = vset.pattern.permute.xlu0 0
    %73 = vperm.xlu0 %72, %v25
    %v74 = vpop.permute.xlu0 %73
    %77 = vset.pattern.permute.xlu0 0
    %78 = vperm.xlu0 %77, %v26
    %v79 = vpop.permute.xlu0 %78
    %82 = vset.pattern.permute.xlu0 0
    %83 = vperm.xlu0 %82, %v27
    %v84 = vpop.permute.xlu0 %83
    %87 = vset.pattern.permute.xlu0 0
    %88 = vperm.xlu0 %87, %v28
    %v89 = vpop.permute.xlu0 %88
    %92 = vset.pattern.permute.xlu0 0
    %93 = vperm.xlu0 %92, %v29
    %v94 = vpop.permute.xlu0 %93
    %97 = vset.pattern.permute.xlu0 0
    %98 = vperm.xlu0 %97, %v30
    %v99 = vpop.permute.xlu0 %98
    %102 = vset.pattern.permute.xlu0 0
    %103 = vperm.xlu0 %102, %v31
    %v104 = vpop.permute.xlu0 %103
    %107 = vset.pattern.permute.xlu0 0
    %108 = vperm.xlu0 %107, %v32
    %v109 = vpop.permute.xlu0 %108
    %112 = vset.pattern.permute.xlu0 0
    %113 = vperm.xlu0 %112, %v33
    %v114 = vpop.permute.xlu0 %113
    %117 = vset.pattern.permute.xlu0 0
    %118 = vperm.xlu0 %117, %v34
    %v119 = vpop.permute.xlu0 %118
    %122 = vset.pattern.permute.xlu0 0
    %123 = vperm.xlu0 %122, %v35
    %v124 = vpop.permute.xlu0 %123
    %127 = vset.pattern.permute.xlu0 0
    %128 = vperm.xlu0 %127, %v36
    %v129 = vpop.permute.xlu0 %128
    %132 = vset.pattern.permute.xlu0 0
    %133 = vperm.xlu0 %132, %v37
    %v134 = vpop.permute.xlu0 %133
    %v152 = vunpack.c.l.b16 %v40
    %v153 = vunpack.c.l.b16 %v41
    %v154 = vunpack.c.l.b16 %v42
    %v155 = vunpack.c.l.b16 %v43
    %v156 = vunpack.c.l.b16 %v44
    %v157 = vunpack.c.l.b16 %v45
    %v158 = vunpack.c.l.b16 %v46
    %v159 = vunpack.c.l.b16 %v47
    %v160 = vunpack.c.l.b16 %v48
    %v161 = vunpack.c.l.b16 %v49
    %v162 = vunpack.c.l.b16 %v50
    %v163 = vunpack.c.l.b16 %v51
    %v164 = vunpack.c.l.b16 %v52
    %v165 = vunpack.c.l.b16 %v53
    %v166 = vunpack.c.l.b16 %v54
    %v167 = vunpack.c.l.b16 %v55
    %v168 = vpack.c.b16 %v153, %v152
    %v169 = vpack.c.b16 %v155, %v154
    %v170 = vpack.c.b16 %v157, %v156
    %v171 = vpack.c.b16 %v159, %v158
    %v172 = vpack.c.b16 %v161, %v160
    %v173 = vpack.c.b16 %v163, %v162
    %v174 = vpack.c.b16 %v165, %v164
    %v175 = vpack.c.b16 %v167, %v166
    %v178 = vunpack.c.l.b16 %v38
    %v179 = vunpack.c.l.b16 %v39
    %v180 = vpack.c.b16 %v179, %v178
    %vm182 = vcmask 130048
    %v184 = vsel %vm182, %v168, 0
    %v187 = vsel %vm182, %v169, 0
    %v190 = vsel %vm182, %v170, 0
    %v193 = vsel %vm182, %v171, 0
    %v196 = vsel %vm182, %v172, 0
    %v199 = vsel %vm182, %v173, 0
    %v202 = vsel %vm182, %v174, 0
    %v205 = vsel %vm182, %v175, 0
    %207 = vmatpush.bf16.msra.mxu0 0
    %208 = vmatpush.bf16.msra.mxu0 0
    %209 = vmatpush.bf16.msra.mxu0 0
    %210 = vmatpush.bf16.msra.mxu0 0
    %211 = vmatpush.bf16.msra.mxu0 0
    %212 = vmatpush.bf16.msra.mxu0 0
    %213 = vmatpush.bf16.msra.mxu0 0
    %214 = vmatpush.bf16.msra.mxu0 %v180
    %215 = vmatmul.bf16.gmra.mxu0 %v184
    %v216 = vpop.f32.mrf.mxu0
    %v217 = vadd.f32 %v59, %v216
    %v218 = vpop.f32.mrf.mxu0
    %v219 = vadd.f32 %v64, %v218
    %220 = vmatmul.bf16.gmra.mxu0 %v187
    %v221 = vpop.f32.mrf.mxu0
    %v222 = vadd.f32 %v69, %v221
    %v223 = vpop.f32.mrf.mxu0
    %v224 = vadd.f32 %v74, %v223
    %225 = vmatmul.bf16.gmra.mxu0 %v190
    %v226 = vpop.f32.mrf.mxu0
    %v227 = vadd.f32 %v79, %v226
    %v228 = vpop.f32.mrf.mxu0
    %v229 = vadd.f32 %v84, %v228
    %230 = vmatmul.bf16.gmra.mxu0 %v193
    %v231 = vpop.f32.mrf.mxu0
    %v232 = vadd.f32 %v89, %v231
    %v233 = vpop.f32.mrf.mxu0
    %v234 = vadd.f32 %v94, %v233
    %235 = vmatmul.bf16.gmra.mxu0 %v196
    %v236 = vpop.f32.mrf.mxu0
    %v237 = vadd.f32 %v99, %v236
    %v238 = vpop.f32.mrf.mxu0
    %v239 = vadd.f32 %v104, %v238
    %240 = vmatmul.bf16.gmra.mxu0 %v199
    %v241 = vpop.f32.mrf.mxu0
    %v242 = vadd.f32 %v109, %v241
    %v243 = vpop.f32.mrf.mxu0
    %v244 = vadd.f32 %v114, %v243
    %245 = vmatmul.bf16.gmra.mxu0 %v202
    %v246 = vpop.f32.mrf.mxu0
    %v247 = vadd.f32 %v119, %v246
    %v248 = vpop.f32.mrf.mxu0
    %v249 = vadd.f32 %v124, %v248
    %250 = vmatmul.bf16.gmra.mxu0 %v205
    %v251 = vpop.f32.mrf.mxu0
    %v252 = vadd.f32 %v129, %v251
    %v253 = vpop.f32.mrf.mxu0
    %v254 = vadd.f32 %v134, %v253
    %255 = vdwg.mxu0
    %v256 = vmax.f32 %v217, 0.0
    %v257 = vmax.f32 %v219, 0.0
    %v258 = vmax.f32 %v222, 0.0
    %v259 = vmax.f32 %v224, 0.0
    %v260 = vmax.f32 %v227, 0.0
    %v261 = vmax.f32 %v229, 0.0
    %v262 = vmax.f32 %v232, 0.0
    %v263 = vmax.f32 %v234, 0.0
    %v264 = vmax.f32 %v237, 0.0
    %v265 = vmax.f32 %v239, 0.0
    %v266 = vmax.f32 %v242, 0.0
    %v267 = vmax.f32 %v244, 0.0
    %v268 = vmax.f32 %v247, 0.0
    %v269 = vmax.f32 %v249, 0.0
    %v270 = vmax.f32 %v252, 0.0
    %v271 = vmax.f32 %v254, 0.0
    %v272 = vld [vmem:[%s2] sm:$0xf]
    %v273 = vld [vmem:[%s2 + $0x4] sm:$0xf]
    %v274 = vld [vmem:[%s2 + $0x8] sm:$0xf]
    %v275 = vld [vmem:[%s2 + $0xc] sm:$0xf]
    %v276 = vld [vmem:[%s2 + $0x10] sm:$0xf]
    %v277 = vld [vmem:[%s2 + $0x14] sm:$0xf]
    %v278 = vld [vmem:[%s2 + $0x18] sm:$0xf]
    %v279 = vld [vmem:[%s2 + $0x1c] sm:$0xf]
    %v280 = vpack.c.bf16 %v257, %v256
    %v281 = vpack.c.bf16 %v259, %v258
    %v282 = vpack.c.bf16 %v261, %v260
    %v283 = vpack.c.bf16 %v263, %v262
    %v284 = vpack.c.bf16 %v265, %v264
    %v285 = vpack.c.bf16 %v267, %v266
    %v286 = vpack.c.bf16 %v269, %v268
    %v287 = vpack.c.bf16 %v271, %v270
    %288 = vset.pattern.permute.xlu0 1
    %289 = vperm.xlu0 %288, %v22
    %v290 = vpop.permute.xlu0 %289
    %292 = vset.pattern.permute.xlu0 1
    %293 = vperm.xlu0 %292, %v23
    %v294 = vpop.permute.xlu0 %293
    %296 = vset.pattern.permute.xlu0 1
    %297 = vperm.xlu0 %296, %v24
    %v298 = vpop.permute.xlu0 %297
    %300 = vset.pattern.permute.xlu0 1
    %301 = vperm.xlu0 %300, %v25
    %v302 = vpop.permute.xlu0 %301
    %304 = vset.pattern.permute.xlu0 1
    %305 = vperm.xlu0 %304, %v26
    %v306 = vpop.permute.xlu0 %305
    %308 = vset.pattern.permute.xlu0 1
    %309 = vperm.xlu0 %308, %v27
    %v310 = vpop.permute.xlu0 %309
    %312 = vset.pattern.permute.xlu0 1
    %313 = vperm.xlu0 %312, %v28
    %v314 = vpop.permute.xlu0 %313
    %316 = vset.pattern.permute.xlu0 1
    %317 = vperm.xlu0 %316, %v29
    %v318 = vpop.permute.xlu0 %317
    %v328 = vunpack.c.l.b16 %v272
    %v329 = vunpack.c.l.b16 %v273
    %v330 = vunpack.c.l.b16 %v274
    %v331 = vunpack.c.l.b16 %v275
    %v332 = vunpack.c.l.b16 %v276
    %v333 = vunpack.c.l.b16 %v277
    %v334 = vunpack.c.l.b16 %v278
    %v335 = vunpack.c.l.b16 %v279
    %v336 = vpack.c.b16 %v329, %v328
    %v337 = vpack.c.b16 %v331, %v330
    %v338 = vpack.c.b16 %v333, %v332
    %v339 = vpack.c.b16 %v335, %v334
    %344 = vmatpush.bf16.msra.mxu0 %v287
    %345 = vmatpush.bf16.msra.mxu0 %v286
    %346 = vmatpush.bf16.msra.mxu0 %v285
    %347 = vmatpush.bf16.msra.mxu0 %v284
    %348 = vmatpush.bf16.msra.mxu0 %v283
    %349 = vmatpush.bf16.msra.mxu0 %v282
    %350 = vmatpush.bf16.msra.mxu0 %v281
    %351 = vmatpush.bf16.msra.mxu0 %v280
    %352 = vmatmul.bf16.gmra.mxu0 %v336
    %v353 = vpop.f32.mrf.mxu0
    %v354 = vadd.f32 %v290, %v353
    %v355 = vpop.f32.mrf.mxu0
    %v356 = vadd.f32 %v294, %v355
    %357 = vmatmul.bf16.gmra.mxu0 %v337
    %v358 = vpop.f32.mrf.mxu0
    %v359 = vadd.f32 %v298, %v358
    %v360 = vpop.f32.mrf.mxu0
    %v361 = vadd.f32 %v302, %v360
    %362 = vmatmul.bf16.gmra.mxu0 %v338
    %v363 = vpop.f32.mrf.mxu0
    %v364 = vadd.f32 %v306, %v363
    %v365 = vpop.f32.mrf.mxu0
    %v366 = vadd.f32 %v310, %v365
    %367 = vmatmul.bf16.gmra.mxu0 %v339
    %v368 = vpop.f32.mrf.mxu0
    %v369 = vadd.f32 %v314, %v368
    %v370 = vpop.f32.mrf.mxu0
    %v371 = vadd.f32 %v318, %v370
    %372 = vdwg.mxu0
    %v373 = vmax.f32 %v354, 0.0
    %v374 = vmax.f32 %v356, 0.0
    %v375 = vmax.f32 %v359, 0.0
    %v376 = vmax.f32 %v361, 0.0
    %v377 = vmax.f32 %v364, 0.0
    %v378 = vmax.f32 %v366, 0.0
    %v379 = vmax.f32 %v369, 0.0
    %v380 = vmax.f32 %v371, 0.0
    %v381 = vld [vmem:[%s3] sm:$0xf]
    %v382 = vld [vmem:[%s3 + $0x4] sm:$0xf]
    %v383 = vld [vmem:[%s3 + $0x8] sm:$0xf]
    %v384 = vld [vmem:[%s3 + $0xc] sm:$0xf]
    %v385 = vpack.c.bf16 %v374, %v373
    %v386 = vpack.c.bf16 %v376, %v375
    %v387 = vpack.c.bf16 %v378, %v377
    %v388 = vpack.c.bf16 %v380, %v379
    %389 = vset.pattern.permute.xlu0 2
    %390 = vperm.xlu0 %389, %v22
    %v391 = vpop.permute.xlu0 %390
    %393 = vset.pattern.permute.xlu0 2
    %394 = vperm.xlu0 %393, %v23
    %v395 = vpop.permute.xlu0 %394
    %397 = vset.pattern.permute.xlu0 2
    %398 = vperm.xlu0 %397, %v24
    %v399 = vpop.permute.xlu0 %398
    %401 = vset.pattern.permute.xlu0 2
    %402 = vperm.xlu0 %401, %v25
    %v403 = vpop.permute.xlu0 %402
    %v409 = vunpack.c.l.b16 %v381
    %v410 = vunpack.c.l.b16 %v382
    %v411 = vunpack.c.l.b16 %v383
    %v412 = vunpack.c.l.b16 %v384
    %v413 = vpack.c.b16 %v410, %v409
    %v414 = vpack.c.b16 %v412, %v411
    %vm415 = vcmask 523264
    %v417 = vsel %vm415, %v413, 0
    %v420 = vsel %vm415, %v414, 0
    %422 = vmatpush.bf16.msra.mxu0 0
    %423 = vmatpush.bf16.msra.mxu0 0
    %424 = vmatpush.bf16.msra.mxu0 0
    %425 = vmatpush.bf16.msra.mxu0 0
    %426 = vmatpush.bf16.msra.mxu0 %v388
    %427 = vmatpush.bf16.msra.mxu0 %v387
    %428 = vmatpush.bf16.msra.mxu0 %v386
    %429 = vmatpush.bf16.msra.mxu0 %v385
    %430 = vmatmul.bf16.gmra.mxu0 %v417
    %v431 = vpop.f32.mrf.mxu0
    %v432 = vadd.f32 %v391, %v431
    %v433 = vpop.f32.mrf.mxu0
    %v434 = vadd.f32 %v395, %v433
    %435 = vmatmul.bf16.gmra.mxu0 %v420
    %v436 = vpop.f32.mrf.mxu0
    %v437 = vadd.f32 %v399, %v436
    %v438 = vpop.f32.mrf.mxu0
    %v439 = vadd.f32 %v403, %v438
    %440 = vdwg.mxu0
    %v441 = vmax.f32 %v432, 0.0
    %v442 = vmax.f32 %v434, 0.0
    %v443 = vmax.f32 %v437, 0.0
    %v444 = vmax.f32 %v439, 0.0
    %445 = vset.pattern.permute.xlu0 3
    %446 = vperm.xlu0 %445, %v22
    %v447 = vpop.permute.xlu0 %446
    %449 = vset.pattern.permute.xlu0 3
    %450 = vperm.xlu0 %449, %v23
    %v451 = vpop.permute.xlu0 %450
    %453 = vset.pattern.permute.xlu0 3
    %454 = vperm.xlu0 %453, %v24
    %v455 = vpop.permute.xlu0 %454
    %457 = vset.pattern.permute.xlu0 3
    %458 = vperm.xlu0 %457, %v25
    %v459 = vpop.permute.xlu0 %458
    %v461 = vmul.f32 %v441, %v447
    %v462 = vmul.f32 %v442, %v451
    %v463 = vmul.f32 %v443, %v455
    %v464 = vmul.f32 %v444, %v459
    %vm465 = vcmask 64512
    %v466 = vsel %vm465, %v461, 0.0
    %v467 = vsel %vm465, %v462, 0.0
    %v468 = vadd.f32 %v466, %v467
    %v469 = vsel %vm465, %v463, 0.0
    %v470 = vadd.f32 %v468, %v469
    %v471 = vsel %vm465, %v464, 0.0
    %v472 = vadd.f32 %v470, %v471
    %v473 = vrot.slane %v472, 4
    %v474 = vadd.f32 %v472, %v473
    %v475 = vrot.slane %v474, 2
    %v476 = vadd.f32 %v474, %v475
    %v477 = vrot.slane %v476, 1
    %v478 = vadd.f32 %v476, %v477
    %479 = vset.pattern.permute.xlu0 4
    %480 = vperm.xlu0 %479, %v22
    %v481 = vpop.permute.xlu0 %480
    %v483 = vadd.f32 %v478, %v481
    %vm484 = vcmask 57344
    %485 = vst.msk [vmem:[#allocation2] sm:$0x1] %vm484, %v483
    // Predicated region
    $region22: #{housing_nn_forward.1} parent=1 // pred_check
      _
    $region23: #{housing_nn_forward.1} parent=1 // pred_check_branch
      %487 = sbr.rel (0) target = $region25
    $region24: #{housing_nn_forward.1} parent=1 // pred_region
      %489 = vsyncadd [#allocation3], 0
      %s491 = sshll.u32 [#allocation2], 4
      %s492 = int_to_ptr.vmem [resolvable:$true] %s491
      %s493 = sshll.u32 %s5, 4
      %s494 = int_to_ptr.hbm [resolvable:$true] %s493
      %496 = dma.vmem_to_hbm [thread:$0]  %s492, 16, %s494, [#allocation3]
    $region25: #{housing_nn_forward.1} parent=1 // pred_fallthru
      _
    // Predicated region
    $region26: #{housing_nn_forward.1} parent=1 // pred_check
      _
    $region27: #{housing_nn_forward.1} parent=1 // pred_check_branch
      %498 = sbr.rel (0) target = $region29
    $region28: #{housing_nn_forward.1} parent=1 // pred_region
      %500 = dma.done [#allocation3], 16
    $region29: #{housing_nn_forward.1} parent=1 // pred_fallthru
      _
    %501 = vsyncpa [#allocation3], 1

</llo_original>
